<compile_context>
chip_gen: v6e
topology: v6e:2x2x1
jax: 0.10.0
libtpu: 0.0.40
codegen_flags: <defaults>
</compile_context>

<pallas_src>
import functools

import jax
import jax.numpy as jnp
import numpy as np
from jax.experimental import pallas as pl
from jax.experimental.pallas import tpu as pltpu


# ----------------------------------------------------------------------------
# Pallas kernel: one fused affine transform  y = x * A + std * B
# ----------------------------------------------------------------------------
def _fused_affine_kernel(a_ref, b_ref, std_ref, x_ref, y_ref):
    # a_ref / b_ref : (1, CHW)  f32 fused per-position scale / shift
    # std_ref       : (TB, 1)   f32 per-sample std column
    # x_ref / y_ref : (TB, CHW) native dtype (f32 / bf16 / ...)
    x = x_ref[...].astype(jnp.float32)
    y = x * a_ref[...] + std_ref[...] * b_ref[...]
    y_ref[...] = y.astype(y_ref.dtype)


# ----------------------------------------------------------------------------
# Generation-aware tile / VMEM configuration (host-side, cached)
# ----------------------------------------------------------------------------
@functools.lru_cache(maxsize=1)
def _hw_tile_config():
    """Returns (max_block_bytes, vmem_limit_bytes)."""
    phys_vmem = None
    try:
        phys_vmem = int(pltpu.get_tpu_info().vmem_capacity_bytes)
    except Exception:
        phys_vmem = None
    if phys_vmem is None:
        try:
            kind = jax.devices()[0].device_kind.lower()
        except Exception:
            kind = ""
        if ("v5" in kind) or ("v6" in kind):
            phys_vmem = 128 << 20
        else:
            phys_vmem = 64 << 20  # conservative default (covers v7x's 64 MiB)
    if phys_vmem >= (128 << 20):
        # v5e / v6e: bigger tiles, raise the scoped-VMEM limit explicitly
        # (v5e default scoped limit is only 16 MiB).
        return (8 << 20, 64 << 20)
    # v7x-class (64 MiB physical, 32 MiB default scoped) or unknown: stay small
    # so double-buffered in+out (4x block) fits comfortably.
    return (4 << 20, 32 << 20)


# ----------------------------------------------------------------------------
# Jitted wrapper: fuse the layer chain, tile, call the kernel, add log-det.
# ----------------------------------------------------------------------------
@functools.partial(jax.jit, static_argnames=("idx", "reverse"))
def _seqflow_apply(s, b, x, std, idx, reverse):
    L, C = s.shape
    N, Cx, H, W = x.shape
    assert Cx == C
    HW = H * W
    CHW = C * HW

    # ---- vectorized algebraic fusion of the applied chain -> (A, B) ---------
    # Each applied layer l: y = x*a_l + std*c_l.  Composing in order:
    #   A = prod_l a_l ;  B = sum_l c_l * prod_{m>l} a_m   =>  y = x*A + std*B
    if len(idx) == 0:
        A = jnp.ones((C,), jnp.float32)
        B = jnp.zeros((C,), jnp.float32)
        ld_total = jnp.float32(0.0)
    else:
        idx_arr = jnp.asarray(idx, jnp.int32)
        s_sel = s[idx_arr].astype(jnp.float32)  # (Lsel, C)
        b_sel = b[idx_arr].astype(jnp.float32)  # (Lsel, C)
        if reverse:
            a_l = jnp.exp(-s_sel)
            c_l = -b_sel * a_l
        else:
            a_l = jnp.exp(s_sel)
            c_l = b_sel
        cpf = jnp.cumprod(a_l[::-1], axis=0)[::-1]  # cpf[l] = prod_{m>=l} a_m
        A = cpf[0]
        suffix = jnp.concatenate(
            [cpf[1:], jnp.ones((1, C), jnp.float32)], axis=0)  # prod_{m>l} a_m
        B = jnp.sum(c_l * suffix, axis=0)
        # Data-independent log-det of the applied chain (wrapper side).
        ld_total = jnp.float32(HW) * jnp.sum(s_sel) * (1.0 if reverse else -1.0)

    # ---- lane/sublane-dense layout ------------------------------------------
    # TODO(synk): if C*H*W is not a multiple of 128, a lane-padded layout would
    # avoid masked partial stores; not needed for this instantiation (CHW=1024).
    a_row = jnp.repeat(A, HW).reshape(1, CHW)
    b_row = jnp.repeat(B, HW).reshape(1, CHW)

    std1 = jnp.asarray(std, jnp.float32).reshape(-1)
    if std1.shape[0] == 1 and N != 1:
        std1 = jnp.broadcast_to(std1, (N,))
    std_col = std1.reshape(N, 1)

    x2d = x.reshape(N, CHW)  # native dtype, no astype (HBM traffic stays 1R+1W)

    # ---- tiling: generation-aware row tiles, no pad / slice ------------------
    max_block_bytes, vmem_limit = _hw_tile_config()
    itemsize = x2d.dtype.itemsize
    sub = max(8, 32 // itemsize)           # sublane packing: 8 f32, 16 bf16
    row_bytes = CHW * itemsize
    cap_rows = max(sub, ((max_block_bytes // max(row_bytes, 1)) // sub) * sub)

    if N < 16:
        # Tiny batch: one full-batch block (full-dim block is always legal).
        TB, grid_n = N, 1
    else:
        # Split into >= 2 sublane-aligned row tiles (feeds both TCs on v7x via
        # the "parallel" grid axis; negligible overhead on single-TC v5e/v6e),
        # capped so double-buffered in+out stays within the scoped-VMEM budget.
        half_rows = max(sub, (((N + 1) // 2) // sub) * sub)
        TB = min(cap_rows, half_rows)
        grid_n = -(-N // TB)               # ragged last block: writes masked

    y2d = pl.pallas_call(
        _fused_affine_kernel,
        grid=(grid_n,),
        in_specs=[
            pl.BlockSpec((1, CHW), lambda i: (0, 0)),    # fused scale row
            pl.BlockSpec((1, CHW), lambda i: (0, 0)),    # fused shift row
            pl.BlockSpec((TB, 1), lambda i: (i, 0)),     # std column
            pl.BlockSpec((TB, CHW), lambda i: (i, 0)),   # x tile (native dtype)
        ],
        out_specs=pl.BlockSpec((TB, CHW), lambda i: (i, 0)),
        out_shape=jax.ShapeDtypeStruct((N, CHW), x2d.dtype),
        compiler_params=pltpu.CompilerParams(
            dimension_semantics=("parallel",),
            vmem_limit_bytes=vmem_limit),
    )(a_row, b_row, std_col, x2d)

    y = y2d.reshape(N, C, H, W)
    return y, ld_total


# ----------------------------------------------------------------------------
# SequentialFlow wrapper
# ----------------------------------------------------------------------------
class SequentialFlowPallas:
    """Pallas equivalent of SequentialFlow over a chain of affine flow layers."""
    # TODO(synk): the generic container dispatches arbitrary child-layer types;
    # here it is instantiated with per-channel affine flow layers only.

    def __init__(self, log_scales, shifts):
        # log_scales, shifts: (L, C) float32
        self.s = jnp.asarray(log_scales, jnp.float32)
        self.b = jnp.asarray(shifts, jnp.float32)
        assert self.s.shape == self.b.shape and self.s.ndim == 2

    def __call__(self, x, std, logpx=None, reverse=False, inds=None):
        return self.forward(x, std, logpx=logpx, reverse=reverse, inds=inds)

    def forward(self, x, std, logpx=None, reverse=False, inds=None):
        L, C = self.s.shape
        if inds is None:
            inds = range(L - 1, -1, -1) if reverse else range(L)
        idx = tuple(int(i) for i in inds)
        y, ld = _seqflow_apply(self.s, self.b, x, std, idx, bool(reverse))
        if logpx is None:
            return y
        return y, jnp.asarray(logpx, jnp.float32) + ld


# ----------------------------------------------------------------------------
# Pure-JAX reference (mirrors the PyTorch container's forward exactly)
# ----------------------------------------------------------------------------
def ref_forward(s, b, x, std, logpx=None, reverse=False, inds=None):
    L, C = s.shape
    N, _, H, W = x.shape
    if inds is None:
        inds = range(L - 1, -1, -1) if reverse else range(L)
    stdb = jnp.asarray(std, jnp.float32).reshape(-1)
    if stdb.shape[0] == 1 and N != 1:
        stdb = jnp.broadcast_to(stdb, (N,))
    stdb = stdb.reshape(N, 1, 1, 1)
    lp = logpx
    for i in inds:
        sc = s[i].reshape(1, C, 1, 1)
        sh = b[i].reshape(1, C, 1, 1)
        ld = jnp.sum(s[i]) * H * W
        if not reverse:
            x = x * jnp.exp(sc) + stdb * sh
            if lp is not None:
                lp = lp - ld
        else:
            x = (x - stdb * sh) * jnp.exp(-sc)
            if lp is not None:
                lp = lp + ld
    return x if logpx is None else (x, lp)


# ----------------------------------------------------------------------------
if __name__ == "__main__":
    key = jax.random.PRNGKey(0)
    k1, k2, k3, k4, k5, k6 = jax.random.split(key, 6)

    N, C, H, W = 2, 4, 16, 16
    L = 3  # number of flow layers in the chain

    x = jax.random.normal(k1, (N, C, H, W), jnp.float32)
    std = 0.5 + jax.random.uniform(k2, (N,), jnp.float32)
    logpx = jnp.zeros((N,), jnp.float32)
    log_scales = 0.1 * jax.random.normal(k3, (L, C), jnp.float32)
    shifts = jax.random.normal(k4, (L, C), jnp.float32)

    flow = SequentialFlowPallas(log_scales, shifts)

    # forward with logpx
    y, lp = flow(x, std, logpx=logpx, reverse=False)
    y, lp = jax.block_until_ready((y, lp))
    y_ref, lp_ref = ref_forward(log_scales, shifts, x, std, logpx=logpx, reverse=False)
    np.testing.assert_allclose(np.asarray(y), np.asarray(y_ref), rtol=1e-5, atol=1e-5)
    np.testing.assert_allclose(np.asarray(lp), np.asarray(lp_ref), rtol=1e-5, atol=1e-5)

    # reverse with logpx (should invert the forward pass)
    x_back, lp_back = flow(y, std, logpx=lp, reverse=True)
    x_back, lp_back = jax.block_until_ready((x_back, lp_back))
    np.testing.assert_allclose(np.asarray(x_back), np.asarray(x), rtol=1e-4, atol=1e-4)
    np.testing.assert_allclose(np.asarray(lp_back), np.asarray(logpx), rtol=1e-4, atol=1e-4)

    # logpx=None path + custom inds
    y2 = flow(x, std, logpx=None, reverse=False, inds=[2, 0])
    y2 = jax.block_until_ready(y2)
    y2_ref = ref_forward(log_scales, shifts, x, std, logpx=None, reverse=False, inds=[2, 0])
    np.testing.assert_allclose(np.asarray(y2), np.asarray(y2_ref), rtol=1e-5, atol=1e-5)

    # Non-divisible batch: exercises forced >=2-tile split + masked ragged tail
    N2 = 20
    x20 = jax.random.normal(k5, (N2, C, H, W), jnp.float32)
    std20 = 0.5 + jax.random.uniform(k6, (N2,), jnp.float32)
    lp20 = jnp.zeros((N2,), jnp.float32)
    y20, lp20o = flow(x20, std20, logpx=lp20, reverse=False)
    y20, lp20o = jax.block_until_ready((y20, lp20o))
    y20_ref, lp20_ref = ref_forward(log_scales, shifts, x20, std20, logpx=lp20, reverse=False)
    np.testing.assert_allclose(np.asarray(y20), np.asarray(y20_ref), rtol=1e-5, atol=1e-5)
    np.testing.assert_allclose(np.asarray(lp20o), np.asarray(lp20_ref), rtol=1e-5, atol=1e-5)
    x20_back = flow(y20, std20, logpx=None, reverse=True)
    x20_back = jax.block_until_ready(x20_back)
    np.testing.assert_allclose(np.asarray(x20_back), np.asarray(x20), rtol=1e-4, atol=1e-4)

    # bf16 native-dtype I/O path (kernel upcasts internally, stores bf16)
    x_bf = x20.astype(jnp.bfloat16)
    y_bf = flow(x_bf, std20, logpx=None, reverse=False)
    y_bf = jax.block_until_ready(y_bf)
    assert y_bf.dtype == jnp.bfloat16
    y_bf_ref = ref_forward(log_scales, shifts, x_bf, std20, logpx=None, reverse=False)
    np.testing.assert_allclose(
        np.asarray(y_bf, dtype=np.float32),
        np.asarray(y_bf_ref.astype(jnp.bfloat16), dtype=np.float32),
        rtol=2e-2, atol=2e-2)

    print("KERNEL_OK")
</pallas_src>

<mosaic_0001>
module attributes {stable_mosaic.version = 11 : i64} {
  func.func @_fused_affine_kernel(%arg0: i32, %arg1: memref<1x1024xf32, #tpu.memory_space<vmem>>, %arg2: memref<1x1024xf32, #tpu.memory_space<vmem>>, %arg3: memref<2x1xf32, #tpu.memory_space<vmem>>, %arg4: memref<2x1024xf32, #tpu.memory_space<vmem>>, %arg5: memref<2x1024xf32, #tpu.memory_space<vmem>>) attributes {dimension_semantics = [#tpu.dimension_semantics<parallel>], iteration_bounds = array<i64: 1>, scalar_prefetch = 0 : i64, scratch_operands = 0 : i64, tpu.core_type = #tpu.core_type<tc>, window_params = [{pipeline_mode = #tpu.pipeline_mode<synchronous>, transform_indices = @transform_0, window_bounds = array<i64: 1, 1024>}, {pipeline_mode = #tpu.pipeline_mode<synchronous>, transform_indices = @transform_1, window_bounds = array<i64: 1, 1024>}, {transform_indices = @transform_2, window_bounds = array<i64: 2, 1>}, {transform_indices = @transform_3, window_bounds = array<i64: 2, 1024>}, {transform_indices = @transform_4, window_bounds = array<i64: 2, 1024>}]} {
    %c0 = arith.constant 0 : index
    %c0_0 = arith.constant 0 : index
    %0 = vector.load %arg4[%c0, %c0_0] : memref<2x1024xf32, #tpu.memory_space<vmem>>, vector<2x1024xf32>
    %c0_1 = arith.constant 0 : index
    %c0_2 = arith.constant 0 : index
    %1 = vector.load %arg1[%c0_1, %c0_2] : memref<1x1024xf32, #tpu.memory_space<vmem>>, vector<1x1024xf32>
    %2 = vector.broadcast %1 : vector<1x1024xf32> to vector<2x1024xf32>
    %3 = arith.mulf %0, %2 : vector<2x1024xf32>
    %c0_3 = arith.constant 0 : index
    %c0_4 = arith.constant 0 : index
    %4 = vector.load %arg3[%c0_3, %c0_4] : memref<2x1xf32, #tpu.memory_space<vmem>>, vector<2x1xf32>
    %c0_5 = arith.constant 0 : index
    %c0_6 = arith.constant 0 : index
    %5 = vector.load %arg2[%c0_5, %c0_6] : memref<1x1024xf32, #tpu.memory_space<vmem>>, vector<1x1024xf32>
    %6 = vector.broadcast %4 : vector<2x1xf32> to vector<2x1024xf32>
    %7 = vector.broadcast %5 : vector<1x1024xf32> to vector<2x1024xf32>
    %8 = arith.mulf %6, %7 : vector<2x1024xf32>
    %9 = arith.addf %3, %8 : vector<2x1024xf32>
    %c0_7 = arith.constant 0 : index
    %c0_8 = arith.constant 0 : index
    %10 = vector.load %arg5[%c0_7, %c0_8] : memref<2x1024xf32, #tpu.memory_space<vmem>>, vector<2x1024xf32>
    tpu.vector_store %arg5[%c0_7, %c0_8], %9 {strides = array<i32>} : memref<2x1024xf32, #tpu.memory_space<vmem>>, vector<2x1024xf32>,
    return
  }
  func.func @transform_0(%arg0: i32) -> (i32, i32) {
    %c0_i32 = arith.constant 0 : i32
    %c0_i32_0 = arith.constant 0 : i32
    %c0_i32_1 = arith.constant 0 : i32
    return %c0_i32, %c0_i32_0 : i32, i32
  }
  func.func @transform_1(%arg0: i32) -> (i32, i32) {
    %c0_i32 = arith.constant 0 : i32
    %c0_i32_0 = arith.constant 0 : i32
    %c0_i32_1 = arith.constant 0 : i32
    return %c0_i32, %c0_i32_0 : i32, i32
  }
  func.func @transform_2(%arg0: i32) -> (i32, i32) {
    %c0_i32 = arith.constant 0 : i32
    %c0_i32_0 = arith.constant 0 : i32
    return %arg0, %c0_i32 : i32, i32
  }
  func.func @transform_3(%arg0: i32) -> (i32, i32) {
    %c0_i32 = arith.constant 0 : i32
    %c0_i32_0 = arith.constant 0 : i32
    return %arg0, %c0_i32 : i32, i32
  }
  func.func @transform_4(%arg0: i32) -> (i32, i32) {
    %c0_i32 = arith.constant 0 : i32
    %c0_i32_0 = arith.constant 0 : i32
    return %arg0, %c0_i32 : i32, i32
  }
}

</mosaic_0001>

<llo_original>
// kernel: reverse.1
$region0: #{reverse.1}
  %s0 = inlined_call_operand.vmem [shape: f32[2,4], index: 0, kind: input, shape index: {}]
  %s1 = inlined_call_operand.vmem [shape: f32[2,4], index: 1, kind: output, shape index: {}]
  $region1: #{reverse.1} parent=0
    #allocation0 [shape = 'u8[8192]{0}', space=vmem, size = 0x2000, scoped, tag = 'operand span for operand 0']
    #allocation1 [shape = 'u8[2048]{0}', space=vmem, size = 0x800, scoped, tag = 'packed  for operand 0']
    #allocation2 [shape = 'u8[4096]{0}', space=vmem, size = 0x1000, scoped, tag = 'operand span for operand 1']
    #allocation3 [shape = 'u8[1024]{0}', space=vmem, size = 0x400, scoped, tag = 'packed  for operand 1']
    %s2 = scalar_lea.vmem [#allocation1], 2
    // Predicated region
    $region2: #{reverse.1} parent=1 // pred_check
      _
    $region3: #{reverse.1} parent=1 // pred_check_branch
      %4 = sbr.rel (0) target = $region5
    $region4: #{reverse.1} parent=1 // pred_region
      // Predicated region
      $region6: #{reverse.1} parent=4 // pred_check
        _
      $region7: #{reverse.1} parent=4 // pred_check_branch
        %6 = sbr.rel target = $region9
      $region8: #{reverse.1} parent=4 // pred_region
        // Predicated region
        $region21: #{reverse.1} parent=8 // pred_check
          _
        $region22: #{reverse.1} parent=8 // pred_check_branch
          %22 = sbr.rel (0) target = $region24
        $region23: #{reverse.1} parent=8 // pred_region
          %s24 = ssub.s32 4, 1
          loop: start=0, step=1, limit=1
          $region25: #{reverse.1} parent=23 // loop_pre_header
            _
          $region26: #{reverse.1} parent=23 // loop_header
            %s26 = sphi 0, %s30
            %p27 = scmp.ge.s32.totalorder %s26, 1
            %s31 = sphi %s0, %s0
            %s32 = sphi %s2, %s2
          $region27: #{reverse.1} parent=23 // loop_header_branch
            %29 = sbr.rel (%p27) target = $region31
          $region28: #{reverse.1} parent=23 // loop_body
            %v33 = vld [vmem:[%s31] sm:%s24]
            %34 = vst [vmem:[%s32] sm:%s24] %v33
          $region29: #{reverse.1} parent=23 // loop_footer
            %s30 = sadd.s32 1, %s26
          $region30: #{reverse.1} parent=23 // loop_footer_branch
            %25 = sbr.rel target = $region26
          $region31: #{reverse.1} parent=23 // loop_exit
            _
        $region24: #{reverse.1} parent=8 // pred_fallthru
          _
      $region9: #{reverse.1} parent=4 // pred_fallthru
        _
      // Predicated region
      $region10: #{reverse.1} parent=4 // pred_check
        _
      $region11: #{reverse.1} parent=4 // pred_check_branch
        %8 = sbr.rel (0) target = $region13
      $region12: #{reverse.1} parent=4 // pred_region
        %s10 = ssub.s32 4, 1
        loop: start=0, step=1, limit=1
        $region14: #{reverse.1} parent=12 // loop_pre_header
          _
        $region15: #{reverse.1} parent=12 // loop_header
          %s12 = sphi 0, %s16
          %p13 = scmp.ge.s32.totalorder %s12, 1
          %s17 = sphi %s0, %s0
          %s18 = sphi %s2, %s2
        $region16: #{reverse.1} parent=12 // loop_header_branch
          %15 = sbr.rel (%p13) target = $region20
        $region17: #{reverse.1} parent=12 // loop_body
          %v19 = vld [vmem:[%s17] sm:%s10]
          %20 = vst [vmem:[%s18] sm:%s10] %v19
        $region18: #{reverse.1} parent=12 // loop_footer
          %s16 = sadd.s32 1, %s12
        $region19: #{reverse.1} parent=12 // loop_footer_branch
          %11 = sbr.rel target = $region15
        $region20: #{reverse.1} parent=12 // loop_exit
          _
      $region13: #{reverse.1} parent=4 // pred_fallthru
        _
    $region5: #{reverse.1} parent=1 // pred_fallthru
      _
    %35 = vnop
    %s37 = sshll.u32 1, 2
    %s38 = ssub.s32 %s37, 1
    %s39 = scalar_lea.vmem [#allocation1], 2
    %v40 = vld [vmem:[%s39] sm:%s38]
    %s41 = scalar_lea.vmem [#allocation0], 8
    %42 = vst [vmem:[%s41] sm:%s38] %v40
    %v43 = vld [vmem:[#allocation1] sm:%s38]
    %44 = vst [vmem:[#allocation0] sm:%s38] %v43
    %s45 = scalar_lea.vmem [#allocation0], 7
    %v46 = vld [vmem:[%s45] ss:$-1 sm:$0xff]
    %v47 = vrot.slane %v46, 6
    %48 = vst [vmem:[#allocation2] sm:$0xff] %v47
    %s49 = scalar_lea.vmem [#allocation0], 8
    %s50 = scalar_lea.vmem %s49, 7 [#allocation0]
    %v51 = vld [vmem:[%s50] ss:$-1 sm:$0xff]
    %v52 = vrot.slane %v51, 6
    %v53 = vlaneseq
    %v54 = vshrl.u32 %v53, 7
    %vm55 = vcmp.lt.s32.totalorder %v54, 2
    %56 = vst.msk [vmem:[#allocation2] sm:$0xff] %vm55, %v52
    %s58 = sshll.u32 1, 2
    %s59 = ssub.s32 %s58, 1
    %v61 = vld [vmem:[#allocation2] sm:%s59]
    %s62 = sshll.u32 1, 2
    %s63 = ssub.s32 %s62, 1
    %64 = vst [vmem:[#allocation3] sm:%s63] %v61
    // Predicated region
    $region32: #{reverse.1} parent=1 // pred_check
      _
    $region33: #{reverse.1} parent=1 // pred_check_branch
      %66 = sbr.rel (0) target = $region35
    $region34: #{reverse.1} parent=1 // pred_region
      // Predicated region
      $region36: #{reverse.1} parent=34 // pred_check
        _
      $region37: #{reverse.1} parent=34 // pred_check_branch
        %68 = sbr.rel target = $region39
      $region38: #{reverse.1} parent=34 // pred_region
        // Predicated region
        $region51: #{reverse.1} parent=38 // pred_check
          _
        $region52: #{reverse.1} parent=38 // pred_check_branch
          %84 = sbr.rel (0) target = $region54
        $region53: #{reverse.1} parent=38 // pred_region
          %s86 = ssub.s32 4, 1
          loop: start=0, step=1, limit=1
          $region55: #{reverse.1} parent=53 // loop_pre_header
            _
          $region56: #{reverse.1} parent=53 // loop_header
            %s88 = sphi 0, %s92
            %p89 = scmp.ge.s32.totalorder %s88, 1
            %s93 = sphi [#allocation3], [#allocation3]
            %s94 = sphi %s1, %s1
          $region57: #{reverse.1} parent=53 // loop_header_branch
            %91 = sbr.rel (%p89) target = $region61
          $region58: #{reverse.1} parent=53 // loop_body
            %v95 = vld [vmem:[%s93] sm:%s86]
            %96 = vst [vmem:[%s94] sm:%s86] %v95
          $region59: #{reverse.1} parent=53 // loop_footer
            %s92 = sadd.s32 1, %s88
          $region60: #{reverse.1} parent=53 // loop_footer_branch
            %87 = sbr.rel target = $region56
          $region61: #{reverse.1} parent=53 // loop_exit
            _
        $region54: #{reverse.1} parent=38 // pred_fallthru
          _
      $region39: #{reverse.1} parent=34 // pred_fallthru
        _
      // Predicated region
      $region40: #{reverse.1} parent=34 // pred_check
        _
      $region41: #{reverse.1} parent=34 // pred_check_branch
        %70 = sbr.rel (0) target = $region43
      $region42: #{reverse.1} parent=34 // pred_region
        %s72 = ssub.s32 4, 1
        loop: start=0, step=1, limit=1
        $region44: #{reverse.1} parent=42 // loop_pre_header
          _
        $region45: #{reverse.1} parent=42 // loop_header
          %s74 = sphi 0, %s78
          %p75 = scmp.ge.s32.totalorder %s74, 1
          %s79 = sphi [#allocation3], [#allocation3]
          %s80 = sphi %s1, %s1
        $region46: #{reverse.1} parent=42 // loop_header_branch
          %77 = sbr.rel (%p75) target = $region50
        $region47: #{reverse.1} parent=42 // loop_body
          %v81 = vld [vmem:[%s79] sm:%s72]
          %82 = vst [vmem:[%s80] sm:%s72] %v81
        $region48: #{reverse.1} parent=42 // loop_footer
          %s78 = sadd.s32 1, %s74
        $region49: #{reverse.1} parent=42 // loop_footer_branch
          %73 = sbr.rel target = $region45
        $region50: #{reverse.1} parent=42 // loop_exit
          _
      $region43: #{reverse.1} parent=34 // pred_fallthru
        _
    $region35: #{reverse.1} parent=1 // pred_fallthru
      _
    %97 = vnop

// kernel: _seqflow_apply.1
$region0: #{_seqflow_apply.1}
  #allocation0 [shape = 'u32[]', space=smem, size = 0x4, offset = 0x4, fixed_abs, tag = 'smem constant byte address 0x4 - core index']
  #allocation1 [shape = 'u32[144,128]{1,0:T(1,128)}', space=vmem, size = 0x12000, scoped, tag = 'internal scratch']
  %s0 = inlined_call_operand.vmem [shape: f32[1,1024], index: 0, kind: input, shape index: {}]
  %s1 = inlined_call_operand.vmem [shape: f32[1,1024], index: 1, kind: input, shape index: {}]
  %s2 = inlined_call_operand.vmem [shape: f32[2,1], index: 2, kind: input, shape index: {}]
  %s3 = inlined_call_operand.vmem [shape: f32[2,1024], index: 3, kind: input, shape index: {}]
  %s4 = inlined_call_operand.vmem [shape: f32[2,1024], index: 4, kind: output, shape index: {}]
  %s5 = sld [smem:[#allocation0]]
  $region26: #{_seqflow_apply.1} parent=0
    _
  %s7 = ssub.s32 1, %s5
  %s8 = scalar_select 0, %s7, %s5
  // Predicated region
  $region2: #{_seqflow_apply.1} parent=0 // pred_check
    _
  $region3: #{_seqflow_apply.1} parent=0 // pred_check_branch
    %10 = sbr.rel (0) target = $region5
  $region4: #{_seqflow_apply.1} parent=0 // pred_region
    _
  $region5: #{_seqflow_apply.1} parent=0 // pred_fallthru
    _
  // Predicated region
  $region6: #{_seqflow_apply.1} parent=0 // pred_check
    _
  $region7: #{_seqflow_apply.1} parent=0 // pred_check_branch
    %12 = sbr.rel (0) target = $region9
  $region8: #{_seqflow_apply.1} parent=0 // pred_region
    _
  $region9: #{_seqflow_apply.1} parent=0 // pred_fallthru
    _
  // Predicated region
  $region10: #{_seqflow_apply.1} parent=0 // pred_check
    _
  $region11: #{_seqflow_apply.1} parent=0 // pred_check_branch
    %14 = sbr.rel (0) target = $region13
  $region12: #{_seqflow_apply.1} parent=0 // pred_region
    _
  $region13: #{_seqflow_apply.1} parent=0 // pred_fallthru
    _
  // Predicated region
  $region14: #{_seqflow_apply.1} parent=0 // pred_check
    _
  $region15: #{_seqflow_apply.1} parent=0 // pred_check_branch
    %16 = sbr.rel (0) target = $region17
  $region16: #{_seqflow_apply.1} parent=0 // pred_region
    _
  $region17: #{_seqflow_apply.1} parent=0 // pred_fallthru
    _
  %v17 = vld [vmem:[%s3] sm:$0xff]
  %v18 = vld [vmem:[%s3 + $0x8] sm:$0xff]
  %v19 = vld [vmem:[%s0] sm:$0xff]
  %v21 = vlaneseq
  %v22 = vshrl.u32 %v21, 7
  %v23 = vsub.s32 0, %v22
  %v24 = vrot.slane %v19, %v23
  %v25 = vlaneseq
  %v26 = vshrl.u32 %v25, 7
  %v27 = vsub.s32 1, %v26
  %v28 = vrot.slane %v19, %v27
  %v29 = vlaneseq
  %v30 = vshrl.u32 %v29, 7
  %v31 = vsub.s32 2, %v30
  %v32 = vrot.slane %v19, %v31
  %v33 = vlaneseq
  %v34 = vshrl.u32 %v33, 7
  %v35 = vsub.s32 3, %v34
  %v36 = vrot.slane %v19, %v35
  %v37 = vlaneseq
  %v38 = vshrl.u32 %v37, 7
  %v39 = vsub.s32 4, %v38
  %v40 = vrot.slane %v19, %v39
  %v41 = vlaneseq
  %v42 = vshrl.u32 %v41, 7
  %v43 = vsub.s32 5, %v42
  %v44 = vrot.slane %v19, %v43
  %v45 = vlaneseq
  %v46 = vshrl.u32 %v45, 7
  %v47 = vsub.s32 6, %v46
  %v48 = vrot.slane %v19, %v47
  %v49 = vlaneseq
  %v50 = vshrl.u32 %v49, 7
  %v51 = vsub.s32 7, %v50
  %v52 = vrot.slane %v19, %v51
  %v53 = vcombine.low %v24, %v28
  %v54 = vcombine.low %v32, %v36
  %v56 = vunpack.c.l.s4 1983009808
  %v57 = vunpack.c.0.s8 %v56
  %v58 = vlaneseq
  %v59 = vshrl.u32 %v58, 7
  %v60 = vsub.s32 %v57, %v59
  %v61 = vrot.slane %v53, %v60
  %v63 = vunpack.c.l.s4 1983009808
  %v64 = vunpack.c.0.s8 %v63
  %v65 = vlaneseq
  %v66 = vshrl.u32 %v65, 7
  %v67 = vsub.s32 %v64, %v66
  %v68 = vrot.slane %v54, %v67
  %v69 = vcombine.low %v61, %v68
  %v70 = vcombine.low %v40, %v44
  %v71 = vcombine.low %v48, %v52
  %v73 = vunpack.c.l.s4 1983009808
  %v74 = vunpack.c.0.s8 %v73
  %v75 = vlaneseq
  %v76 = vshrl.u32 %v75, 7
  %v77 = vsub.s32 %v74, %v76
  %v78 = vrot.slane %v70, %v77
  %v80 = vunpack.c.l.s4 1983009808
  %v81 = vunpack.c.0.s8 %v80
  %v82 = vlaneseq
  %v83 = vshrl.u32 %v82, 7
  %v84 = vsub.s32 %v81, %v83
  %v85 = vrot.slane %v71, %v84
  %v86 = vcombine.low %v78, %v85
  %v89 = vmul.f32 %v17, %v69
  %v90 = vmul.f32 %v18, %v86
  %v91 = vld [vmem:[%s2] sm:$0x3]
  %v92 = vld [vmem:[%s1] sm:$0xff]
  %94 = vset.pattern.permute.xlu0 0
  %95 = vperm.xlu0 %94, %v91
  %v96 = vpop.permute.xlu0 %95
  %v99 = vlaneseq
  %v100 = vshrl.u32 %v99, 7
  %v101 = vsub.s32 0, %v100
  %v102 = vrot.slane %v92, %v101
  %v103 = vlaneseq
  %v104 = vshrl.u32 %v103, 7
  %v105 = vsub.s32 1, %v104
  %v106 = vrot.slane %v92, %v105
  %v107 = vlaneseq
  %v108 = vshrl.u32 %v107, 7
  %v109 = vsub.s32 2, %v108
  %v110 = vrot.slane %v92, %v109
  %v111 = vlaneseq
  %v112 = vshrl.u32 %v111, 7
  %v113 = vsub.s32 3, %v112
  %v114 = vrot.slane %v92, %v113
  %v115 = vlaneseq
  %v116 = vshrl.u32 %v115, 7
  %v117 = vsub.s32 4, %v116
  %v118 = vrot.slane %v92, %v117
  %v119 = vlaneseq
  %v120 = vshrl.u32 %v119, 7
  %v121 = vsub.s32 5, %v120
  %v122 = vrot.slane %v92, %v121
  %v123 = vlaneseq
  %v124 = vshrl.u32 %v123, 7
  %v125 = vsub.s32 6, %v124
  %v126 = vrot.slane %v92, %v125
  %v127 = vlaneseq
  %v128 = vshrl.u32 %v127, 7
  %v129 = vsub.s32 7, %v128
  %v130 = vrot.slane %v92, %v129
  %v139 = vmul.f32 %v96, %v102
  %v140 = vmul.f32 %v96, %v106
  %v141 = vmul.f32 %v96, %v110
  %v142 = vmul.f32 %v96, %v114
  %v143 = vmul.f32 %v96, %v118
  %v144 = vmul.f32 %v96, %v122
  %v145 = vmul.f32 %v96, %v126
  %v146 = vmul.f32 %v96, %v130
  %v155 = vcombine.low %v139, %v140
  %v156 = vcombine.low %v141, %v142
  %v158 = vunpack.c.l.s4 1983009808
  %v159 = vunpack.c.0.s8 %v158
  %v160 = vlaneseq
  %v161 = vshrl.u32 %v160, 7
  %v162 = vsub.s32 %v159, %v161
  %v163 = vrot.slane %v155, %v162
  %v165 = vunpack.c.l.s4 1983009808
  %v166 = vunpack.c.0.s8 %v165
  %v167 = vlaneseq
  %v168 = vshrl.u32 %v167, 7
  %v169 = vsub.s32 %v166, %v168
  %v170 = vrot.slane %v156, %v169
  %v171 = vcombine.low %v163, %v170
  %v172 = vcombine.low %v143, %v144
  %v173 = vcombine.low %v145, %v146
  %v175 = vunpack.c.l.s4 1983009808
  %v176 = vunpack.c.0.s8 %v175
  %v177 = vlaneseq
  %v178 = vshrl.u32 %v177, 7
  %v179 = vsub.s32 %v176, %v178
  %v180 = vrot.slane %v172, %v179
  %v182 = vunpack.c.l.s4 1983009808
  %v183 = vunpack.c.0.s8 %v182
  %v184 = vlaneseq
  %v185 = vshrl.u32 %v184, 7
  %v186 = vsub.s32 %v183, %v185
  %v187 = vrot.slane %v173, %v186
  %v188 = vcombine.low %v180, %v187
  %v191 = vadd.f32 %v89, %v171
  %v192 = vadd.f32 %v90, %v188
  %193 = vst [vmem:[%s4] sm:$0xff] %v191
  %194 = vst [vmem:[%s4 + $0x8] sm:$0xff] %v192
  // Predicated region
  $region18: #{_seqflow_apply.1} parent=0 // pred_check
    _
  $region19: #{_seqflow_apply.1} parent=0 // pred_check_branch
    %196 = sbr.rel (0) target = $region21
  $region20: #{_seqflow_apply.1} parent=0 // pred_region
    _
  $region21: #{_seqflow_apply.1} parent=0 // pred_fallthru
    _
  // Predicated region
  $region22: #{_seqflow_apply.1} parent=0 // pred_check
    _
  $region23: #{_seqflow_apply.1} parent=0 // pred_check_branch
    %198 = sbr.rel (0) target = $region25
  $region24: #{_seqflow_apply.1} parent=0 // pred_region
    _
  $region25: #{_seqflow_apply.1} parent=0 // pred_fallthru
    _

</llo_original>
